<compile_context>
chip_gen: v5e
topology: v5e:2x2
jax: 0.10.0
libtpu: 0.0.40
codegen_flags: <defaults>
</compile_context>

<pallas_src>
import functools
import math

import jax
import jax.numpy as jnp
from jax.experimental import pallas as pl
from jax.experimental.pallas import tpu as pltpu

EPS = 1e-10
GAMMA = 2  # integer exponent -> lowered as v * v (matches torch.pow(v, 2))


def _cdiv(a, b):
    return -(-a // b)


def _round_up(a, b):
    return _cdiv(a, b) * b


def _choose_tiles(rows, C, S, *, lane_cap=1024, elem_cap=8192, min_cells=8):
    """Pick (R, GB, TS, GS): rows/lanes per block and grid extents."""
    # Rows per block: a multiple of C (softmax groups never straddle a block)
    # and of 8 sublanes (full vreg packing), unless the whole row axis is
    # smaller than that, in which case the full dim is used.
    r_unit = C * (8 // math.gcd(C, 8))          # lcm(C, 8)
    R = r_unit if rows >= r_unit else rows
    GB = _cdiv(rows, R)

    if S < 128:                                  # tiny spatial extent
        return R, GB, S, 1

    S128 = _round_up(S, 128)
    ts_max = (S // 128) * 128                    # a block never exceeds the array
    cap = max(128, min(lane_cap, (elem_cap // max(R, 1)) // 128 * 128, ts_max))
    GS = _cdiv(S128, cap)
    if GB * GS < min_cells:                      # v7x megacore / pipelining
        GS = min(max(GS, _cdiv(min_cells, GB)), S128 // 128)
    TS = min(_round_up(_cdiv(S128, GS), 128), ts_max)
    GS = _cdiv(S128, TS)
    return R, GB, TS, GS


def _ordinal_loss_kernel(x_ref, y_ref, out_ref, *, C, R, TS, rows, S,
                         mask_rows, mask_lanes):
    x = x_ref[...].astype(jnp.float32)           # (R, TS)
    y = y_ref[...].astype(jnp.float32)

    # Ragged batch/spatial tails: zero both inputs there (numerically
    # transparent for both the CE and the EMD term).
    if mask_rows or mask_lanes:
        valid = None
        if mask_rows:
            gr = pl.program_id(0) * R + jax.lax.broadcasted_iota(
                jnp.int32, (R, TS), 0)
            valid = gr < rows
        if mask_lanes:
            gl = pl.program_id(1) * TS + jax.lax.broadcasted_iota(
                jnp.int32, (R, TS), 1)
            lane_ok = gl < S
            valid = lane_ok if valid is None else (valid & lane_ok)
        x = jnp.where(valid, x, 0.0)
        y = jnp.where(valid, y, 0.0)

    # ---- focal cross-entropy partial (sign and /B are applied outside) ----
    one_m_x = 1.0 - x
    ce_term = ((one_m_x * one_m_x) * jnp.log(x + EPS) * y
               + (x * x) * jnp.log(one_m_x + EPS) * (1.0 - y))
    ce_part = jnp.sum(ce_term)

    # ---- EMD partial -------------------------------------------------------
    # cumsum_c(softmax_c(v)) == cumsum_c(exp(v)) * recip(sum_c(exp(v))).
    # Inputs are probability-like in (0, 1), so exp is bounded by e and the
    # usual max-subtraction is unnecessary.
    within = jax.lax.broadcasted_iota(jnp.int32, (R, TS), 0) % C
    ex = jnp.exp(x)
    ey = jnp.exp(y)

    def seg_cumsum(v):
        # Hillis-Steele inclusive scan within each C-row group: sublane rolls
        # (XLU slot) + iota mask, no concatenate copies.
        k = 1
        while k < C:
            v = v + jnp.where(within >= k, pltpu.roll(v, shift=k, axis=0), 0.0)
            k *= 2
        return v

    def seg_broadcast_last(v):
        # Propagate each group's last row (the group total) to every row.
        k = 1
        while k < C:
            pulled = pltpu.roll(v, shift=R - k, axis=0)   # pulled[i] == v[i+k]
            v = jnp.where(within < C - k, pulled, v)
            k *= 2
        return v

    cum_x = seg_cumsum(ex)
    cum_y = seg_cumsum(ey)
    tot_x = seg_broadcast_last(cum_x)            # softmax denominators, per row
    tot_y = seg_broadcast_last(cum_y)
    inv_x = pl.reciprocal(tot_x, approx=True)
    inv_x = inv_x * (2.0 - tot_x * inv_x)        # one Newton step -> f32 accuracy
    inv_y = pl.reciprocal(tot_y, approx=True)
    inv_y = inv_y * (2.0 - tot_y * inv_y)
    d = cum_x * inv_x - cum_y * inv_y
    emd_part = jnp.sum(d * d)

    # One lane-dense (2, 128) partial block per grid cell -> single output DMA.
    out_ref[...] = jnp.concatenate(
        [jnp.full((1, 128), ce_part, jnp.float32),
         jnp.full((1, 128), emd_part, jnp.float32)], axis=0)[None, None]


def ordinal_loss(x, y):
    """Pallas TPU implementation of ordinalLoss.forward -> (ce, EMD_loss)."""
    assert x.shape == y.shape
    B, C = int(x.shape[0]), int(x.shape[1])
    S = 1
    for dim in x.shape[2:]:
        S *= int(dim)
    S = max(S, 1)
    rows = B * C

    # Free layout change: batch*channel onto sublanes, spatial onto lanes.
    # Inputs keep their native dtype for the HBM->VMEM DMA (cast in-kernel).
    x2 = x.reshape(rows, S)
    y2 = y.reshape(rows, S)

    R, GB, TS, GS = _choose_tiles(rows, C, S)
    mask_rows = (GB * R != rows)
    mask_lanes = (GS * TS != S)

    kernel = functools.partial(
        _ordinal_loss_kernel, C=C, R=R, TS=TS, rows=rows, S=S,
        mask_rows=mask_rows, mask_lanes=mask_lanes)

    partials = pl.pallas_call(
        kernel,
        out_shape=jax.ShapeDtypeStruct((GB, GS, 2, 128), jnp.float32),
        grid_spec=pltpu.PrefetchScalarGridSpec(
            num_scalar_prefetch=0,
            grid=(GB, GS),
            in_specs=[pl.BlockSpec((R, TS), lambda i, j: (i, j)),
                      pl.BlockSpec((R, TS), lambda i, j: (i, j))],
            out_specs=pl.BlockSpec((1, 1, 2, 128), lambda i, j: (i, j, 0, 0)),
        ),
        compiler_params=pltpu.CompilerParams(
            dimension_semantics=("parallel", "parallel")),
    )(x2, y2)

    # Tiny cross-cell reduction + finalize outside (keeps the grid parallel).
    ce = -jnp.sum(partials[:, :, 0, 0]) / jnp.float32(B)
    emd = jnp.sum(partials[:, :, 1, 0])
    return ce, emd


def _reference(x, y):
    ce = -jnp.sum((1.0 - x) ** GAMMA * jnp.log(x + EPS) * y
                  + x ** GAMMA * jnp.log(1.0 - x + EPS) * (1.0 - y)) / x.shape[0]
    xs = jax.nn.softmax(x, axis=1)
    ys = jax.nn.softmax(y, axis=1)
    xc = jnp.cumsum(xs, axis=1)
    yc = jnp.cumsum(ys, axis=1)
    emd = jnp.sum((xc - yc) ** 2)
    return ce, emd


if __name__ == "__main__":
    key = jax.random.PRNGKey(0)
    kx, ky = jax.random.split(key)
    B, C, H, W = 2, 4, 16, 16
    # x, y are probability-like maps in (0, 1), matching intended module usage.
    x = jax.random.uniform(kx, (B, C, H, W), jnp.float32, minval=0.01, maxval=0.99)
    y = jax.random.uniform(ky, (B, C, H, W), jnp.float32, minval=0.0, maxval=1.0)

    ce, emd = ordinal_loss(x, y)
    jax.block_until_ready((ce, emd))

    ce_ref, emd_ref = _reference(x, y)
    assert jnp.allclose(ce, ce_ref, rtol=1e-4, atol=1e-4), (ce, ce_ref)
    assert jnp.allclose(emd, emd_ref, rtol=1e-4, atol=1e-4), (emd, emd_ref)
    print("KERNEL_OK")
</pallas_src>

<mosaic_0001>
module attributes {stable_mosaic.version = 11 : i64} {
  func.func @_ordinal_loss_kernel(%arg0: i32, %arg1: i32, %arg2: memref<8x128xf32, #tpu.memory_space<vmem>>, %arg3: memref<8x128xf32, #tpu.memory_space<vmem>>, %arg4: memref<1x1x2x128xf32, #tpu.memory_space<vmem>>) attributes {dimension_semantics = [#tpu.dimension_semantics<parallel>, #tpu.dimension_semantics<parallel>], iteration_bounds = array<i64: 1, 2>, scalar_prefetch = 0 : i64, scratch_operands = 0 : i64, tpu.core_type = #tpu.core_type<tc>, window_params = [{transform_indices = @transform_0, window_bounds = array<i64: 8, 128>}, {transform_indices = @transform_1, window_bounds = array<i64: 8, 128>}, {transform_indices = @transform_2, window_bounds = array<i64: 1, 1, 2, 128>}]} {
    %c0 = arith.constant 0 : index
    %c0_0 = arith.constant 0 : index
    %0 = vector.load %arg2[%c0, %c0_0] : memref<8x128xf32, #tpu.memory_space<vmem>>, vector<8x128xf32>
    %c0_1 = arith.constant 0 : index
    %c0_2 = arith.constant 0 : index
    %1 = vector.load %arg3[%c0_1, %c0_2] : memref<8x128xf32, #tpu.memory_space<vmem>>, vector<8x128xf32>
    %cst = arith.constant 1.000000e+00 : f32
    %2 = vector.broadcast %cst : f32 to vector<8x128xf32>
    %3 = arith.subf %2, %0 : vector<8x128xf32>
    %4 = arith.mulf %3, %3 : vector<8x128xf32>
    %cst_3 = arith.constant 1.000000e-10 : f32
    %5 = vector.broadcast %cst_3 : f32 to vector<8x128xf32>
    %6 = arith.addf %0, %5 : vector<8x128xf32>
    %7 = math.log %6 : vector<8x128xf32>
    %8 = arith.mulf %4, %7 : vector<8x128xf32>
    %9 = arith.mulf %8, %1 : vector<8x128xf32>
    %10 = arith.mulf %0, %0 : vector<8x128xf32>
    %cst_4 = arith.constant 1.000000e-10 : f32
    %11 = vector.broadcast %cst_4 : f32 to vector<8x128xf32>
    %12 = arith.addf %3, %11 : vector<8x128xf32>
    %13 = math.log %12 : vector<8x128xf32>
    %14 = arith.mulf %10, %13 : vector<8x128xf32>
    %cst_5 = arith.constant 1.000000e+00 : f32
    %15 = vector.broadcast %cst_5 : f32 to vector<8x128xf32>
    %16 = arith.subf %15, %1 : vector<8x128xf32>
    %17 = arith.mulf %14, %16 : vector<8x128xf32>
    %18 = arith.addf %9, %17 : vector<8x128xf32>
    %19 = vector.shape_cast %18 : vector<8x128xf32> to vector<1x8x128xf32>
    %cst_6 = arith.constant dense<0.000000e+00> : vector<1xf32>
    %20 = vector.multi_reduction <add>, %19, %cst_6 [1, 2] : vector<1x8x128xf32> to vector<1xf32>
    %21 = vector.shape_cast %20 : vector<1xf32> to vector<1x1x1xf32>
    %22 = vector.extract %21[0, 0, 0] : f32 from vector<1x1x1xf32>
    %23 = tpu.iota {dimensions = array<i32: 0>} : vector<8x128xi32>
    %c4_i32 = arith.constant 4 : i32
    %c0_i32 = arith.constant 0 : i32
    %24 = arith.cmpi eq, %c4_i32, %c0_i32 : i32
    %c1_i32 = arith.constant 1 : i32
    %25 = arith.select %24, %c1_i32, %c4_i32 : i32
    %26 = vector.broadcast %25 : i32 to vector<8x128xi32>
    %27 = arith.remsi %23, %26 : vector<8x128xi32>
    %c0_i32_7 = arith.constant 0 : i32
    %28 = vector.broadcast %c0_i32_7 : i32 to vector<8x128xi32>
    %29 = arith.cmpi ne, %27, %28 : vector<8x128xi32>
    %c0_i32_8 = arith.constant 0 : i32
    %30 = vector.broadcast %c0_i32_8 : i32 to vector<8x128xi32>
    %31 = arith.cmpi slt, %27, %30 : vector<8x128xi32>
    %c0_i32_9 = arith.constant 0 : i32
    %32 = arith.cmpi slt, %25, %c0_i32_9 : i32
    %33 = vector.broadcast %32 : i1 to vector<8x128xi1>
    %34 = vector.broadcast %33 : vector<8x128xi1> to vector<8x128xi1>
    %35 = arith.xori %31, %34 : vector<8x128xi1>
    %36 = arith.andi %35, %29 : vector<8x128xi1>
    %37 = vector.broadcast %25 : i32 to vector<8x128xi32>
    %38 = arith.addi %27, %37 : vector<8x128xi32>
    %39 = arith.select %36, %38, %27 : vector<8x128xi1>, vector<8x128xi32>
    %40 = math.exp %0 : vector<8x128xf32>
    %41 = math.exp %1 : vector<8x128xf32>
    %c1_i32_10 = arith.constant 1 : i32
    %42 = vector.broadcast %c1_i32_10 : i32 to vector<8x128xi32>
    %43 = arith.cmpi sge, %39, %42 : vector<8x128xi32>
    %c1_i32_11 = arith.constant 1 : i32
    %44 = tpu.dynamic_rotate %40 by %c1_i32_11 dim 0 : vector<8x128xf32>, i32 -> vector<8x128xf32>
    %cst_12 = arith.constant 0.000000e+00 : f32
    %45 = vector.broadcast %cst_12 : f32 to vector<8x128xf32>
    %46 = arith.select %43, %44, %45 : vector<8x128xi1>, vector<8x128xf32>
    %47 = arith.addf %40, %46 : vector<8x128xf32>
    %c2_i32 = arith.constant 2 : i32
    %48 = vector.broadcast %c2_i32 : i32 to vector<8x128xi32>
    %49 = arith.cmpi sge, %39, %48 : vector<8x128xi32>
    %c2_i32_13 = arith.constant 2 : i32
    %50 = tpu.dynamic_rotate %47 by %c2_i32_13 dim 0 : vector<8x128xf32>, i32 -> vector<8x128xf32>
    %cst_14 = arith.constant 0.000000e+00 : f32
    %51 = vector.broadcast %cst_14 : f32 to vector<8x128xf32>
    %52 = arith.select %49, %50, %51 : vector<8x128xi1>, vector<8x128xf32>
    %53 = arith.addf %47, %52 : vector<8x128xf32>
    %c1_i32_15 = arith.constant 1 : i32
    %54 = vector.broadcast %c1_i32_15 : i32 to vector<8x128xi32>
    %55 = arith.cmpi sge, %39, %54 : vector<8x128xi32>
    %c1_i32_16 = arith.constant 1 : i32
    %56 = tpu.dynamic_rotate %41 by %c1_i32_16 dim 0 : vector<8x128xf32>, i32 -> vector<8x128xf32>
    %cst_17 = arith.constant 0.000000e+00 : f32
    %57 = vector.broadcast %cst_17 : f32 to vector<8x128xf32>
    %58 = arith.select %55, %56, %57 : vector<8x128xi1>, vector<8x128xf32>
    %59 = arith.addf %41, %58 : vector<8x128xf32>
    %c2_i32_18 = arith.constant 2 : i32
    %60 = vector.broadcast %c2_i32_18 : i32 to vector<8x128xi32>
    %61 = arith.cmpi sge, %39, %60 : vector<8x128xi32>
    %c2_i32_19 = arith.constant 2 : i32
    %62 = tpu.dynamic_rotate %59 by %c2_i32_19 dim 0 : vector<8x128xf32>, i32 -> vector<8x128xf32>
    %cst_20 = arith.constant 0.000000e+00 : f32
    %63 = vector.broadcast %cst_20 : f32 to vector<8x128xf32>
    %64 = arith.select %61, %62, %63 : vector<8x128xi1>, vector<8x128xf32>
    %65 = arith.addf %59, %64 : vector<8x128xf32>
    %c7_i32 = arith.constant 7 : i32
    %66 = tpu.dynamic_rotate %53 by %c7_i32 dim 0 : vector<8x128xf32>, i32 -> vector<8x128xf32>
    %c3_i32 = arith.constant 3 : i32
    %67 = vector.broadcast %c3_i32 : i32 to vector<8x128xi32>
    %68 = arith.cmpi slt, %39, %67 : vector<8x128xi32>
    %69 = arith.select %68, %66, %53 : vector<8x128xi1>, vector<8x128xf32>
    %c6_i32 = arith.constant 6 : i32
    %70 = tpu.dynamic_rotate %69 by %c6_i32 dim 0 : vector<8x128xf32>, i32 -> vector<8x128xf32>
    %c2_i32_21 = arith.constant 2 : i32
    %71 = vector.broadcast %c2_i32_21 : i32 to vector<8x128xi32>
    %72 = arith.cmpi slt, %39, %71 : vector<8x128xi32>
    %73 = arith.select %72, %70, %69 : vector<8x128xi1>, vector<8x128xf32>
    %c7_i32_22 = arith.constant 7 : i32
    %74 = tpu.dynamic_rotate %65 by %c7_i32_22 dim 0 : vector<8x128xf32>, i32 -> vector<8x128xf32>
    %c3_i32_23 = arith.constant 3 : i32
    %75 = vector.broadcast %c3_i32_23 : i32 to vector<8x128xi32>
    %76 = arith.cmpi slt, %39, %75 : vector<8x128xi32>
    %77 = arith.select %76, %74, %65 : vector<8x128xi1>, vector<8x128xf32>
    %c6_i32_24 = arith.constant 6 : i32
    %78 = tpu.dynamic_rotate %77 by %c6_i32_24 dim 0 : vector<8x128xf32>, i32 -> vector<8x128xf32>
    %c2_i32_25 = arith.constant 2 : i32
    %79 = vector.broadcast %c2_i32_25 : i32 to vector<8x128xi32>
    %80 = arith.cmpi slt, %39, %79 : vector<8x128xi32>
    %81 = arith.select %80, %78, %77 : vector<8x128xi1>, vector<8x128xf32>
    %82 = tpu.reciprocal %73 {approx = true} : vector<8x128xf32> -> vector<8x128xf32>
    %83 = arith.mulf %73, %82 : vector<8x128xf32>
    %cst_26 = arith.constant 2.000000e+00 : f32
    %84 = vector.broadcast %cst_26 : f32 to vector<8x128xf32>
    %85 = arith.subf %84, %83 : vector<8x128xf32>
    %86 = arith.mulf %82, %85 : vector<8x128xf32>
    %87 = tpu.reciprocal %81 {approx = true} : vector<8x128xf32> -> vector<8x128xf32>
    %88 = arith.mulf %81, %87 : vector<8x128xf32>
    %cst_27 = arith.constant 2.000000e+00 : f32
    %89 = vector.broadcast %cst_27 : f32 to vector<8x128xf32>
    %90 = arith.subf %89, %88 : vector<8x128xf32>
    %91 = arith.mulf %87, %90 : vector<8x128xf32>
    %92 = arith.mulf %53, %86 : vector<8x128xf32>
    %93 = arith.mulf %65, %91 : vector<8x128xf32>
    %94 = arith.subf %92, %93 : vector<8x128xf32>
    %95 = arith.mulf %94, %94 : vector<8x128xf32>
    %96 = vector.shape_cast %95 : vector<8x128xf32> to vector<1x8x128xf32>
    %cst_28 = arith.constant dense<0.000000e+00> : vector<1xf32>
    %97 = vector.multi_reduction <add>, %96, %cst_28 [1, 2] : vector<1x8x128xf32> to vector<1xf32>
    %98 = vector.shape_cast %97 : vector<1xf32> to vector<1x1x1xf32>
    %99 = vector.extract %98[0, 0, 0] : f32 from vector<1x1x1xf32>
    %100 = vector.broadcast %22 : f32 to vector<1x128xf32>
    %101 = vector.broadcast %99 : f32 to vector<1x128xf32>
    %102 = tpu.concatenate %100, %101 in 0 : vector<1x128xf32>, vector<1x128xf32> -> vector<2x128xf32>
    %103 = vector.shape_cast %102 : vector<2x128xf32> to vector<1x1x2x128xf32>
    %c0_29 = arith.constant 0 : index
    %c0_30 = arith.constant 0 : index
    %c0_31 = arith.constant 0 : index
    %c0_32 = arith.constant 0 : index
    %104 = vector.load %arg4[%c0_29, %c0_30, %c0_31, %c0_32] : memref<1x1x2x128xf32, #tpu.memory_space<vmem>>, vector<1x1x2x128xf32>
    tpu.vector_store %arg4[%c0_29, %c0_30, %c0_31, %c0_32], %103 {strides = array<i32>} : memref<1x1x2x128xf32, #tpu.memory_space<vmem>>, vector<1x1x2x128xf32>,
    return
  }
  func.func @transform_0(%arg0: i32, %arg1: i32) -> (i32, i32) {
    %c0_i32 = arith.constant 0 : i32
    return %arg0, %arg1 : i32, i32
  }
  func.func @transform_1(%arg0: i32, %arg1: i32) -> (i32, i32) {
    %c0_i32 = arith.constant 0 : i32
    return %arg0, %arg1 : i32, i32
  }
  func.func @transform_2(%arg0: i32, %arg1: i32) -> (i32, i32, i32, i32) {
    %c0_i32 = arith.constant 0 : i32
    %c0_i32_0 = arith.constant 0 : i32
    %c0_i32_1 = arith.constant 0 : i32
    return %arg0, %arg1, %c0_i32, %c0_i32_0 : i32, i32, i32, i32
  }
}

</mosaic_0001>

<llo_original>
// kernel: tpu_custom_call.1
$region0: #{tpu_custom_call.1}
  #allocation0 [shape = 'u32[]', space=smem, size = 0x4, offset = 0x4, fixed_abs, tag = 'smem constant byte address 0x4 - core index']
  #allocation1 [shape = 'u32[72,128]{1,0:T(1,128)}', space=vmem, size = 0x9000, scoped, tag = 'internal scratch']
  %s0 = inlined_call_operand.hbm [shape: f32[8,256], index: 0, kind: input, shape index: {}]
  %s1 = inlined_call_operand.hbm [shape: f32[8,256], index: 1, kind: input, shape index: {}]
  %s2 = inlined_call_operand.hbm [shape: f32[1,2,2,128], index: 2, kind: output, shape index: {}]
  %s3 = sld [smem:[#allocation0]]
  $region49: #{tpu_custom_call.1} parent=0
    _
  %s5 = ssub.s32 1, %s3
  %s6 = scalar_select 0, %s5, %s3
  $region1: #{tpu_custom_call.1} parent=0
    #allocation2 [shape = 'u8[8192]{0}', space=vmem, size = 0x2000, scoped, tag = 'input window, operand 0']
    #allocation3 [shape = 's32[2]{0}', space=sflag, size = 0x8, scoped, tag = 'scoped memory for tpu_custom_call.1']
    #allocation4 [shape = 's32[2]{0}', space=sflag, size = 0x8, scoped, tag = 'scoped memory for tpu_custom_call.1']
    #allocation5 [shape = 'u8[8192]{0}', space=vmem, size = 0x2000, scoped, tag = 'input window, operand 1']
    #allocation6 [shape = 's32[2]{0}', space=sflag, size = 0x8, scoped, tag = 'scoped memory for tpu_custom_call.1']
    #allocation7 [shape = 'u8[2048]{0}', space=vmem, size = 0x800, scoped, tag = 'output window, operand 0']
    %7 = vsyncpa [#allocation3], 0
    %s8 = scalar_lea.sflag [#allocation3], 1
    %9 = vsyncpa %s8, 0
    %10 = vsyncpa [#allocation6], 0
    %s11 = scalar_lea.sflag [#allocation6], 1
    %12 = vsyncpa %s11, 0
    %13 = vsyncpa [#allocation4], 0
    %s14 = scalar_lea.sflag [#allocation4], 1
    %15 = vsyncpa %s14, 0
    loop: start=0, step=1, limit=4
    $region2: #{tpu_custom_call.1} parent=1 // loop_pre_header
      _
    $region3: #{tpu_custom_call.1} parent=1 // loop_header
      %s17 = sphi 0, %s21
      %p18 = scmp.ge.s32.totalorder %s17, 4
      %s24 = sphi 0, %s36
      %s25 = sphi 0, %s32
      %s26 = sphi 0, %s24
      %s27 = sphi 0, %s25
      %s28 = sphi 0, %s26
      %s29 = sphi 0, %s27
      %s41 = sphi 0, %s43
      %s44 = sphi 0, %s41
      %s45 = sphi 0, %s44
      %s61 = sphi 0, %s45
      %s69 = sphi 0, %s71
      %s72 = sphi 0, %s69
      %s73 = sphi 0, %s72
      %s89 = sphi 0, %s73
      %s97 = sphi 0, %s99
      %s100 = sphi 0, %s97
      %s101 = sphi 0, %s100
      %s117 = sphi 0, %s101
    $region4: #{tpu_custom_call.1} parent=1 // loop_header_branch
      %20 = sbr.rel (%p18) target = $region8
    $region5: #{tpu_custom_call.1} parent=1 // loop_body
      %s22 = ssub.s32 %s17, 1
      %s23 = ssub.s32 %s17, 2
      %s30 = sadd.s32 1, %s25
      %p31 = scmp.ge.s32.totalorder %s30, 2
      %s32 = scalar_select %p31, 0, %s30
      %s33 = sadd.s32 1, %s24
      %s34 = scalar_select %p31, %s33, %s24
      %p35 = scmp.ge.s32.totalorder %s34, 1
      %s36 = scalar_select %p35, 0, %s34
      %s37 = ssub.s32 %s24, %s36
      %s38 = ssub.s32 %s25, %s32
      %s39 = sor.u32 %s37, %s38
      %p40 = scmp.eq.s32.totalorder %s39, 0
      %s42 = sadd.s32 %s41, 1
      %s43 = scalar_select %p40, %s41, %s42
      %p46 = pneg %p40
      %p47 = scmp.eq.s32.totalorder %s17, 1
      %p48 = por %p46, %p47
      %p49 = scmp.ne.s32.totalorder %s41, %s44
      %p50 = scmp.eq.s32.totalorder %s17, 0
      %p51 = por %p49, %p50
      %p52 = scmp.ne.s32.totalorder %s41, %s44
      %p53 = scmp.eq.s32.totalorder %s22, 1
      %p54 = por %p52, %p53
      %p55 = scmp.ne.s32.totalorder %s44, %s45
      %p56 = scmp.eq.s32.totalorder %s22, 0
      %p57 = por %p55, %p56
      %p58 = scmp.ne.s32.totalorder %s44, %s45
      %p59 = scmp.eq.s32.totalorder %s23, 1
      %p60 = por %p58, %p59
      %p62 = scmp.ne.s32.totalorder %s45, %s61
      %p63 = scmp.eq.s32.totalorder %s23, 0
      %p64 = por %p62, %p63
      %s65 = ssub.s32 %s24, %s36
      %s66 = ssub.s32 %s25, %s32
      %s67 = sor.u32 %s65, %s66
      %p68 = scmp.eq.s32.totalorder %s67, 0
      %s70 = sadd.s32 %s69, 1
      %s71 = scalar_select %p68, %s69, %s70
      %p74 = pneg %p68
      %p75 = scmp.eq.s32.totalorder %s17, 1
      %p76 = por %p74, %p75
      %p77 = scmp.ne.s32.totalorder %s69, %s72
      %p78 = scmp.eq.s32.totalorder %s17, 0
      %p79 = por %p77, %p78
      %p80 = scmp.ne.s32.totalorder %s69, %s72
      %p81 = scmp.eq.s32.totalorder %s22, 1
      %p82 = por %p80, %p81
      %p83 = scmp.ne.s32.totalorder %s72, %s73
      %p84 = scmp.eq.s32.totalorder %s22, 0
      %p85 = por %p83, %p84
      %p86 = scmp.ne.s32.totalorder %s72, %s73
      %p87 = scmp.eq.s32.totalorder %s23, 1
      %p88 = por %p86, %p87
      %p90 = scmp.ne.s32.totalorder %s73, %s89
      %p91 = scmp.eq.s32.totalorder %s23, 0
      %p92 = por %p90, %p91
      %s93 = ssub.s32 %s24, %s36
      %s94 = ssub.s32 %s25, %s32
      %s95 = sor.u32 %s93, %s94
      %p96 = scmp.eq.s32.totalorder %s95, 0
      %s98 = sadd.s32 %s97, 1
      %s99 = scalar_select %p96, %s97, %s98
      %p102 = pneg %p96
      %p103 = scmp.eq.s32.totalorder %s17, 1
      %p104 = por %p102, %p103
      %p105 = scmp.ne.s32.totalorder %s97, %s100
      %p106 = scmp.eq.s32.totalorder %s17, 0
      %p107 = por %p105, %p106
      %p108 = scmp.ne.s32.totalorder %s97, %s100
      %p109 = scmp.eq.s32.totalorder %s22, 1
      %p110 = por %p108, %p109
      %p111 = scmp.ne.s32.totalorder %s100, %s101
      %p112 = scmp.eq.s32.totalorder %s22, 0
      %p113 = por %p111, %p112
      %p114 = scmp.ne.s32.totalorder %s100, %s101
      %p115 = scmp.eq.s32.totalorder %s23, 1
      %p116 = por %p114, %p115
      %p118 = scmp.ne.s32.totalorder %s101, %s117
      %p119 = scmp.eq.s32.totalorder %s23, 0
      %p120 = por %p118, %p119
      %p121 = scmp.le.s32.totalorder 1, %s17
      %p122 = scmp.lt.s32.totalorder %s17, 3
      %p123 = pnand %p121, %p122
      %p124 = pneg %p123
      // Predicated region
      $region9: #{tpu_custom_call.1} parent=5 // pred_check
        _
      $region10: #{tpu_custom_call.1} parent=5 // pred_check_branch
        %126 = sbr.rel (%p123) target = $region12
      $region11: #{tpu_custom_call.1} parent=5 // pred_region
        %s127 = ssub.s32 %s17, 1
      $region12: #{tpu_custom_call.1} parent=5 // pred_fallthru
        _
      %p128 = scmp.lt.s32.totalorder %s17, 2
      // Predicated region
      $region13: #{tpu_custom_call.1} parent=5 // pred_check
        %p129 = pneg %p128
      $region14: #{tpu_custom_call.1} parent=5 // pred_check_branch
        %131 = sbr.rel (%p129) target = $region16
      $region15: #{tpu_custom_call.1} parent=5 // pred_region
        // Predicated region
        $region17: #{tpu_custom_call.1} parent=15 // pred_check
          %p132 = pneg %p51
        $region18: #{tpu_custom_call.1} parent=15 // pred_check_branch
          %134 = sbr.rel (%p132) target = $region20
        $region19: #{tpu_custom_call.1} parent=15 // pred_region
          %s135 = sand.u32 %s41, 1
          %s136 = scalar_lea.sflag [#allocation3], %s135
          %s137 = sand.u32 %s41, 1
          %s138 = smul.addr %s137, 8
          %s139 = scalar_lea.vmem [#allocation2], %s138
          %141 = vsyncadd %s136, 0
          %s142 = smul.addr %s24, 2
          %s143 = sadd.s32 %s25, %s142
          %s144 = smul.addr %s143, 8
          %s145 = scalar_lea.hbm %s0, %s144
          %s147 = sshll.u32 %s145, 4
          %s148 = int_to_ptr.hbm [resolvable:$true] %s147
          %s149 = sshll.u32 %s139, 4
          %s150 = int_to_ptr.vmem [resolvable:$true] %s149
          %152 = dma.hbm_to_vmem [thread:$0]  %s148, 128, %s150, %s136
        $region20: #{tpu_custom_call.1} parent=15 // pred_fallthru
          _
        // Predicated region
        $region21: #{tpu_custom_call.1} parent=15 // pred_check
          %p153 = pneg %p79
        $region22: #{tpu_custom_call.1} parent=15 // pred_check_branch
          %155 = sbr.rel (%p153) target = $region24
        $region23: #{tpu_custom_call.1} parent=15 // pred_region
          %s156 = sand.u32 %s69, 1
          %s157 = scalar_lea.sflag [#allocation6], %s156
          %s158 = sand.u32 %s69, 1
          %s159 = smul.addr %s158, 8
          %s160 = scalar_lea.vmem [#allocation5], %s159
          %162 = vsyncadd %s157, 0
          %s163 = smul.addr %s24, 2
          %s164 = sadd.s32 %s25, %s163
          %s165 = smul.addr %s164, 8
          %s166 = scalar_lea.hbm %s1, %s165
          %s168 = sshll.u32 %s166, 4
          %s169 = int_to_ptr.hbm [resolvable:$true] %s168
          %s170 = sshll.u32 %s160, 4
          %s171 = int_to_ptr.vmem [resolvable:$true] %s170
          %173 = dma.hbm_to_vmem [thread:$0]  %s169, 128, %s171, %s157
        $region24: #{tpu_custom_call.1} parent=15 // pred_fallthru
          _
      $region16: #{tpu_custom_call.1} parent=5 // pred_fallthru
        _
      %p174 = scmp.le.s32.totalorder 1, %s17
      %p175 = scmp.lt.s32.totalorder %s17, 3
      %p176 = pnand %p174, %p175
      %p177 = pneg %p176
      // Predicated region
      $region25: #{tpu_custom_call.1} parent=5 // pred_check
        _
      $region26: #{tpu_custom_call.1} parent=5 // pred_check_branch
        %179 = sbr.rel (%p176) target = $region28
      $region27: #{tpu_custom_call.1} parent=5 // pred_region
        %s180 = ssub.s32 %s17, 1
        %s181 = sand.u32 %s44, 1
        %s182 = scalar_lea.sflag [#allocation3], %s181
        %s183 = sand.u32 %s44, 1
        %s184 = smul.addr %s183, 8
        %s185 = scalar_lea.vmem [#allocation2], %s184
        // Predicated region
        $region29: #{tpu_custom_call.1} parent=27 // pred_check
          %p186 = pneg %p57
        $region30: #{tpu_custom_call.1} parent=27 // pred_check_branch
          %188 = sbr.rel (%p186) target = $region32
        $region31: #{tpu_custom_call.1} parent=27 // pred_region
          %190 = dma.done %s182, 128
        $region32: #{tpu_custom_call.1} parent=27 // pred_fallthru
          _
        %s191 = sand.u32 %s72, 1
        %s192 = scalar_lea.sflag [#allocation6], %s191
        %s193 = sand.u32 %s72, 1
        %s194 = smul.addr %s193, 8
        %s195 = scalar_lea.vmem [#allocation5], %s194
        // Predicated region
        $region33: #{tpu_custom_call.1} parent=27 // pred_check
          %p196 = pneg %p85
        $region34: #{tpu_custom_call.1} parent=27 // pred_check_branch
          %198 = sbr.rel (%p196) target = $region36
        $region35: #{tpu_custom_call.1} parent=27 // pred_region
          %200 = dma.done %s192, 128
        $region36: #{tpu_custom_call.1} parent=27 // pred_fallthru
          _
        %s201 = sand.u32 %s44, 1
        %s202 = scalar_lea.sflag [#allocation3], %s201
        %s203 = sand.u32 %s44, 1
        %s204 = smul.addr %s203, 8
        %s205 = scalar_lea.vmem [#allocation2], %s204
        %p206 = pneg %p57
        %p207 = pneg %p54
        %s208 = sand.u32 %s72, 1
        %s209 = scalar_lea.sflag [#allocation6], %s208
        %s210 = sand.u32 %s72, 1
        %s211 = smul.addr %s210, 8
        %s212 = scalar_lea.vmem [#allocation5], %s211
        %p213 = pneg %p85
        %p214 = pneg %p82
        %p215 = pneg %p113
        %p216 = pneg %p110
        %s217 = sand.u32 %s100, 1
        %s218 = scalar_lea.sflag [#allocation4], %s217
        %s219 = sand.u32 %s100, 1
        %s220 = smul.addr %s219, 2
        %s221 = scalar_lea.vmem [#allocation7], %s220
        %v222 = vld [vmem:[%s185] sm:$0xff]
        %v223 = vld [vmem:[%s195] sm:$0xff]
        %v224 = vsub.f32 1.0, %v222
        %v225 = vmul.f32 %v224, %v224
        %v226 = vadd.f32 %v222, 1e-10
        %v227 = vlog2.pop %v226
        %v228 = vmul.f32 %v227, 0.6931472
        %v229 = vmul.f32 %v225, %v228
        %v230 = vmul.f32 %v229, %v223
        %v231 = vmul.f32 %v222, %v222
        %v232 = vadd.f32 %v224, 1e-10
        %v233 = vlog2.pop %v232
        %v234 = vmul.f32 %v233, 0.6931472
        %v235 = vmul.f32 %v231, %v234
        %v236 = vsub.f32 1.0, %v223
        %v237 = vmul.f32 %v235, %v236
        %v238 = vadd.f32 %v230, %v237
        %239 = vadd.xlane.f32.xlu0 %v238
        %v240 = vpop.xlane.xlu0 %239
        %v241 = vrot.slane %v240, 4
        %v242 = vadd.f32 %v240, %v241
        %v243 = vrot.slane %v242, 2
        %v244 = vadd.f32 %v242, %v243
        %v245 = vrot.slane %v244, 1
        %v246 = vadd.f32 %v244, %v245
        %s247 = vtos %v246
        %v248 = vlaneseq
        %v249 = vshrl.u32 %v248, 7
        %vm250 = vcmp.lt.s32.totalorder %v249, 0
        %v251 = vsub.s32 0, %v249
        %v252 = vsel %vm250, %v251, %v249
        %v253 = vshrl.u32 %v252, 2
        %v254 = vand.u32 %v252, 3
        %v255 = vsub.s32 0, %v254
        %v256 = vsel %vm250, %v255, %v254
        %vm257 = vcmp.ne.s32.totalorder %v256, 0
        %vm258 = vcmp.lt.s32.totalorder %v256, 0
        %vm259 = vmand %vm258, %vm257
        %v260 = vadd.s32 %v256, 4
        %v261 = vsel %vm259, %v260, %v256
        %v262 = vmul.f32 %v222, 1.442695
        %v263 = vpow.pop %v262
        %v264 = vmul.f32 %v223, 1.442695
        %v265 = vpow.pop %v264
        %vm266 = vcmp.ge.s32.totalorder %v261, 1
        %v267 = vrot.slane %v263, 7
        %v268 = vsel %vm266, %v267, 0.0
        %v269 = vadd.f32 %v263, %v268
        %vm270 = vcmp.ge.s32.totalorder %v261, 2
        %v271 = vrot.slane %v269, 6
        %v272 = vsel %vm270, %v271, 0.0
        %v273 = vadd.f32 %v269, %v272
        %v274 = vrot.slane %v265, 7
        %v275 = vsel %vm266, %v274, 0.0
        %v276 = vadd.f32 %v265, %v275
        %v277 = vrot.slane %v276, 6
        %v278 = vsel %vm270, %v277, 0.0
        %v279 = vadd.f32 %v276, %v278
        %v280 = vrot.slane %v273, 1
        %vm281 = vcmp.lt.s32.totalorder %v261, 3
        %v282 = vsel %vm281, %v280, %v273
        %v283 = vrot.slane %v282, 2
        %vm284 = vcmp.lt.s32.totalorder %v261, 2
        %v285 = vsel %vm284, %v283, %v282
        %v286 = vrot.slane %v279, 1
        %v287 = vsel %vm281, %v286, %v279
        %v288 = vrot.slane %v287, 2
        %v289 = vsel %vm284, %v288, %v287
        %v290 = vrcp.pop %v285
        %v291 = vmul.f32 %v285, %v290
        %v292 = vsub.f32 2.0, %v291
        %v293 = vmul.f32 %v290, %v292
        %v294 = vrcp.pop %v289
        %v295 = vmul.f32 %v289, %v294
        %v296 = vsub.f32 2.0, %v295
        %v297 = vmul.f32 %v294, %v296
        %v298 = vmul.f32 %v273, %v293
        %v299 = vmul.f32 %v279, %v297
        %v300 = vsub.f32 %v298, %v299
        %v301 = vmul.f32 %v300, %v300
        %302 = vadd.xlane.f32.xlu0 %v301
        %v303 = vpop.xlane.xlu0 %302
        %v304 = vrot.slane %v303, 4
        %v305 = vadd.f32 %v303, %v304
        %v306 = vrot.slane %v305, 2
        %v307 = vadd.f32 %v305, %v306
        %v308 = vrot.slane %v307, 1
        %v309 = vadd.f32 %v307, %v308
        %s310 = vtos %v309
        %v311 = vstv %s247
        %v312 = vstv %s310
        %vm313 = vcmask 1040384
        %v314 = vsel %vm313, %v311, %v312
        %315 = vst [vmem:[%s221] sm:$0x3] %v314
        %s316 = sand.u32 %s100, 1
        %s317 = scalar_lea.sflag [#allocation4], %s316
        %s318 = sand.u32 %s100, 1
        %s319 = smul.addr %s318, 2
        %s320 = scalar_lea.vmem [#allocation7], %s319
        // Predicated region
        $region37: #{tpu_custom_call.1} parent=27 // pred_check
          %p321 = pneg %p110
        $region38: #{tpu_custom_call.1} parent=27 // pred_check_branch
          %323 = sbr.rel (%p321) target = $region40
        $region39: #{tpu_custom_call.1} parent=27 // pred_region
          %325 = vsyncadd %s317, 0
          %s326 = smul.addr %s26, 2
          %s327 = sadd.s32 %s27, %s326
          %s328 = smul.addr %s327, 2
          %s329 = scalar_lea.hbm %s2, %s328
          %s331 = sshll.u32 %s320, 4
          %s332 = int_to_ptr.vmem [resolvable:$true] %s331
          %s333 = sshll.u32 %s329, 4
          %s334 = int_to_ptr.hbm [resolvable:$true] %s333
          %336 = dma.vmem_to_hbm [thread:$0]  %s332, 32, %s334, %s317
        $region40: #{tpu_custom_call.1} parent=27 // pred_fallthru
          _
      $region28: #{tpu_custom_call.1} parent=5 // pred_fallthru
        _
      %p337 = scmp.le.s32.totalorder 2, %s17
      // Predicated region
      $region41: #{tpu_custom_call.1} parent=5 // pred_check
        %p338 = pneg %p337
      $region42: #{tpu_custom_call.1} parent=5 // pred_check_branch
        %340 = sbr.rel (%p338) target = $region44
      $region43: #{tpu_custom_call.1} parent=5 // pred_region
        %s341 = ssub.s32 %s17, 2
        // Predicated region
        $region45: #{tpu_custom_call.1} parent=43 // pred_check
          %p342 = pneg %p116
        $region46: #{tpu_custom_call.1} parent=43 // pred_check_branch
          %344 = sbr.rel (%p342) target = $region48
        $region47: #{tpu_custom_call.1} parent=43 // pred_region
          %s345 = sand.u32 %s101, 1
          %s346 = scalar_lea.sflag [#allocation4], %s345
          %s347 = sand.u32 %s101, 1
          %s348 = smul.addr %s347, 2
          %s349 = scalar_lea.vmem [#allocation7], %s348
          %351 = dma.done %s346, 32
        $region48: #{tpu_custom_call.1} parent=43 // pred_fallthru
          _
      $region44: #{tpu_custom_call.1} parent=5 // pred_fallthru
        _
    $region6: #{tpu_custom_call.1} parent=1 // loop_footer
      %s21 = sadd.s32 1, %s17
    $region7: #{tpu_custom_call.1} parent=1 // loop_footer_branch
      %16 = sbr.rel target = $region3
    $region8: #{tpu_custom_call.1} parent=1 // loop_exit
      _
    %352 = vsyncpa [#allocation3], 1
    %s353 = scalar_lea.sflag [#allocation3], 1
    %354 = vsyncpa %s353, 1
    %355 = vsyncpa [#allocation6], 1
    %s356 = scalar_lea.sflag [#allocation6], 1
    %357 = vsyncpa %s356, 1
    %358 = vsyncpa [#allocation4], 1
    %s359 = scalar_lea.sflag [#allocation4], 1
    %360 = vsyncpa %s359, 1

</llo_original>
